<compile_context>
chip_gen: v7x
topology: tpu7x:2x2x1
jax: 0.10.0
libtpu: 0.0.40
codegen_flags: <defaults>
</compile_context>

<pallas_src>
import functools

import jax
import jax.numpy as jnp
from jax import lax
from jax.experimental import pallas as pl
from jax.experimental.pallas import tpu as pltpu


def _round_up(x, m):
    return ((x + m - 1) // m) * m


# ---------------------------------------------------------------------------
# Fused kernel: grid = (layer, node-row tile); H resident in VMEM scratch
# ---------------------------------------------------------------------------
def _fused_gcn_kernel(a_ref, x_ref, w_ref, b_ref, o_ref, h_scratch, *,
                      num_layers, num_classes, tile_n):
    l = pl.program_id(0)          # layer index (outer; carries H through scratch)
    r = pl.program_id(1)          # node-row tile index (inner)

    # One-time: stage the padded input features into the activation scratch.
    @pl.when(jnp.logical_and(l == 0, r == 0))
    def _():
        h_scratch[0] = x_ref[...]

    src = l % 2                                   # buffer holding H_l
    dst = 1 - src                                 # buffer receiving H_{l+1}

    h_full = h_scratch[src]                       # (N_pad, F_pad) f32, VMEM-resident
    a_tile = a_ref[...]                           # (tile_n, N_pad) bf16 (or f32)
    w = w_ref[0]                                  # (F_pad, F_pad) f32
    b = b_ref[0]                                  # (1, F_pad) f32

    # N^2 contraction in the adjacency dtype (bf16 halves HBM traffic / 2x MXU),
    # f32 accumulation; the small feature-mix matmul and all elementwise stay f32.
    ah = jnp.dot(a_tile, h_full.astype(a_tile.dtype),
                 preferred_element_type=jnp.float32)
    z = jnp.dot(ah, w, preferred_element_type=jnp.float32) + b   # (tile_n, F_pad)

    is_last = l == num_layers - 1
    row_start = pl.multiple_of(r * tile_n, tile_n)

    @pl.when(jnp.logical_not(is_last))
    def _():
        h_next = jnp.maximum(z, 0.0)              # ReLU; dropout is identity in eval
        o_ref[...] = h_next                       # lane-dense write (overwritten later)

        # Store the new activation tile into the "next" parity buffer.  Static
        # leading index under pl.when keeps the Mosaic store lowering trivial.
        @pl.when(dst == 1)
        def _():
            h_scratch[1, pl.ds(row_start, tile_n), :] = h_next

        @pl.when(dst == 0)
        def _():
            h_scratch[0, pl.ds(row_start, tile_n), :] = h_next

    @pl.when(is_last)
    def _():
        # Row-wise log_softmax over the REAL class columns only.
        col = lax.broadcasted_iota(jnp.int32, z.shape, 1)
        valid = col < num_classes
        zm = jnp.where(valid, z, -jnp.inf)        # padded classes never win the max
        m = jnp.max(zm, axis=1, keepdims=True)
        s = zm - m
        lse = jnp.log(jnp.sum(jnp.exp(s), axis=1, keepdims=True))  # exp(-inf)=0
        o_ref[...] = jnp.where(valid, s - lse, 0.0)


def fused_gcn_forward(a_hat, x, params, *, adj_dtype=jnp.bfloat16, tile_n=None):
    """All GCN layers + final log_softmax in a single pallas_call."""
    n, f_in = x.shape
    num_layers = len(params)
    num_classes = params[-1][0].shape[1]

    lane = 128
    f_pad = _round_up(max([f_in] + [w.shape[1] for w, _ in params]), lane)
    n_pad = _round_up(n, lane)

    if tile_n is None:
        tile_n = 128
        for t in (512, 256, 128):
            if n_pad % t == 0:
                tile_n = t
                break
    assert n_pad % tile_n == 0

    # Zero-padded, lane-dense operands (zeros keep the math exact: padded a_hat
    # columns kill padded H rows; padded W columns / bias entries stay zero).
    a_p = jnp.zeros((n_pad, n_pad), adj_dtype).at[:n, :n].set(a_hat.astype(adj_dtype))
    x_p = jnp.zeros((n_pad, f_pad), jnp.float32).at[:n, :f_in].set(x.astype(jnp.float32))
    w_stack = jnp.zeros((num_layers, f_pad, f_pad), jnp.float32)
    b_stack = jnp.zeros((num_layers, 1, f_pad), jnp.float32)
    for i, (w, b) in enumerate(params):
        w_stack = w_stack.at[i, :w.shape[0], :w.shape[1]].set(w.astype(jnp.float32))
        b2 = b.reshape(1, -1).astype(jnp.float32)
        b_stack = b_stack.at[i, :, :b2.shape[1]].set(b2)

    grid = (num_layers, n_pad // tile_n)
    kernel = functools.partial(_fused_gcn_kernel, num_layers=num_layers,
                               num_classes=num_classes, tile_n=tile_n)

    flops = int(num_layers * (2 * n_pad * n_pad * f_pad + 2 * n_pad * f_pad * f_pad))
    bytes_accessed = int(num_layers * n_pad * n_pad * a_p.dtype.itemsize   # a_hat stream
                         + n_pad * f_pad * 4                               # x (once)
                         + num_layers * (f_pad * f_pad + f_pad) * 4        # weights/bias
                         + num_layers * n_pad * f_pad * 4)                 # output writes
    cost = pl.CostEstimate(flops=flops, transcendentals=int(n_pad * f_pad),
                           bytes_accessed=bytes_accessed)

    out_pad = pl.pallas_call(
        kernel,
        out_shape=jax.ShapeDtypeStruct((n_pad, f_pad), jnp.float32),
        grid_spec=pltpu.PrefetchScalarGridSpec(
            num_scalar_prefetch=0,
            grid=grid,
            in_specs=[
                pl.BlockSpec((tile_n, n_pad), lambda l, r: (r, 0)),       # a_hat row tile
                pl.BlockSpec((n_pad, f_pad), lambda l, r: (0, 0)),        # x (fetched once)
                pl.BlockSpec((1, f_pad, f_pad), lambda l, r: (l, 0, 0)),  # W_l
                pl.BlockSpec((1, 1, f_pad), lambda l, r: (l, 0, 0)),      # b_l
            ],
            out_specs=pl.BlockSpec((tile_n, f_pad), lambda l, r: (r, 0)),
            scratch_shapes=[pltpu.VMEM((2, n_pad, f_pad), jnp.float32)],
        ),
        compiler_params=pltpu.CompilerParams(
            # Layer axis carries H through scratch; row tiles of layer l+1 need all
            # row tiles of layer l -> both axes must stay sequential on one TC.
            dimension_semantics=("arbitrary", "arbitrary"),
            vmem_limit_bytes=64 * 1024 * 1024,
        ),
        cost_estimate=cost,
    )(a_p, x_p, w_stack, b_stack)

    return out_pad[:n, :num_classes]


# ---------------------------------------------------------------------------
# Model glue (plain JAX)
# ---------------------------------------------------------------------------
def normalized_adjacency(edge_index, num_nodes):
    """Dense D^-1/2 (A + I) D^-1/2 from a [2, E] int edge_index."""
    src, dst = edge_index[0], edge_index[1]
    a = jnp.zeros((num_nodes, num_nodes), jnp.float32)
    a = a.at[src, dst].set(1.0)
    a = a.at[dst, src].set(1.0)                      # symmetrize (undirected graph)
    eye = jnp.eye(num_nodes, dtype=jnp.float32)
    a = a * (1.0 - eye) + eye                        # self-loop weight exactly 1
    deg = jnp.sum(a, axis=1)
    d_inv_sqrt = jax.lax.rsqrt(deg)
    return a * d_inv_sqrt[:, None] * d_inv_sqrt[None, :]


def init_params(key, num_features, num_classes, num_layers, hidden=32):
    """Glorot-uniform weights + zero bias, matching PyG GCNConv."""
    dims = [num_features] + [hidden] * (num_layers - 1) + [num_classes]
    params = []
    for fi, fo in zip(dims[:-1], dims[1:]):
        key, kw = jax.random.split(key)
        limit = jnp.sqrt(6.0 / jnp.float32(fi + fo))
        w = jax.random.uniform(kw, (fi, fo), jnp.float32, -limit, limit)
        b = jnp.zeros((1, fo), jnp.float32)
        params.append((w, b))
    return params


def model_forward(x, glove_matrix, a_hat, params, **kw):
    """glove_matrix=None (or identity) is the non-Twitter path: the x @ glove
    matmul is skipped; otherwise it is folded into W1 (A (X G) W1 == A X (G W1))."""
    if glove_matrix is not None:
        (w1, b1), rest = params[0], params[1:]
        params = [(jnp.dot(glove_matrix, w1), b1)] + list(rest)
    return fused_gcn_forward(a_hat, x, params, **kw)


def reference_forward(x, a_hat, params):
    """Pure-JAX f32 reference of the original module (eval mode)."""
    h = x
    for i, (w, b) in enumerate(params):
        h = a_hat @ h @ w + b.reshape(1, -1)
        if i < len(params) - 1:
            h = jnp.maximum(h, 0.0)
    return jax.nn.log_softmax(h, axis=1)


if __name__ == "__main__":
    N_NODES = 64          # nodes in the graph
    NUM_FEATURES = 16     # dataset.num_features
    NUM_CLASSES = 8       # dataset.num_classes
    NUM_LAYERS = 3        # channels: 16 -> 32 -> 32 -> 8
    NUM_EDGES = 128

    key = jax.random.PRNGKey(0)
    k_x, k_e, k_p = jax.random.split(key, 3)

    x = jax.random.normal(k_x, (N_NODES, NUM_FEATURES), jnp.float32)
    edge_index = jax.random.randint(k_e, (2, NUM_EDGES), 0, N_NODES, jnp.int32)
    a_hat = normalized_adjacency(edge_index, N_NODES)
    params = init_params(k_p, NUM_FEATURES, NUM_CLASSES, NUM_LAYERS)

    ref = reference_forward(x, a_hat, params)

    # Exact path (f32 adjacency): semantics check against the JAX reference.
    out_f32 = model_forward(x, None, a_hat, params, adj_dtype=jnp.float32)
    out_f32 = jax.block_until_ready(out_f32)
    assert out_f32.shape == (N_NODES, NUM_CLASSES)
    assert bool(jnp.allclose(out_f32, ref, atol=2e-2, rtol=2e-2))
    assert bool(jnp.allclose(jnp.sum(jnp.exp(out_f32), axis=1), 1.0, atol=1e-3))

    # Fast path (bf16 adjacency, default): halves the N^2 HBM stream.
    out_bf16 = model_forward(x, None, a_hat, params)
    out_bf16 = jax.block_until_ready(out_bf16)
    assert out_bf16.shape == (N_NODES, NUM_CLASSES)
    assert bool(jnp.all(jnp.isfinite(out_bf16)))
    assert bool(jnp.allclose(jnp.sum(jnp.exp(out_bf16), axis=1), 1.0, atol=1e-3))
    assert bool(jnp.allclose(out_bf16, ref, atol=1e-1, rtol=1e-1))

    print("KERNEL_OK")
</pallas_src>

<mosaic_0001>
module attributes {stable_mosaic.version = 11 : i64} {
  func.func @_fused_gcn_kernel(%arg0: i32, %arg1: i32, %arg2: memref<128x128xf32, #tpu.memory_space<vmem>>, %arg3: memref<128x128xf32, #tpu.memory_space<vmem>>, %arg4: memref<1x128x128xf32, #tpu.memory_space<vmem>>, %arg5: memref<1x1x128xf32, #tpu.memory_space<vmem>>, %arg6: memref<128x128xf32, #tpu.memory_space<vmem>>, %arg7: memref<2x128x128xf32, #tpu.memory_space<vmem>>) attributes {dimension_semantics = [#tpu.dimension_semantics<arbitrary>, #tpu.dimension_semantics<arbitrary>], iteration_bounds = array<i64: 3, 1>, scalar_prefetch = 0 : i64, scratch_operands = 1 : i64, tpu.core_type = #tpu.core_type<tc>, window_params = [{transform_indices = @transform_0, window_bounds = array<i64: 128, 128>}, {pipeline_mode = #tpu.pipeline_mode<synchronous>, transform_indices = @transform_1, window_bounds = array<i64: 128, 128>}, {transform_indices = @transform_2, window_bounds = array<i64: 1, 128, 128>}, {transform_indices = @transform_3, window_bounds = array<i64: 1, 1, 128>}, {transform_indices = @transform_4, window_bounds = array<i64: 128, 128>}]} {
    %c0_i32 = arith.constant 0 : i32
    %0 = arith.cmpi eq, %arg0, %c0_i32 : i32
    %c0_i32_0 = arith.constant 0 : i32
    %1 = arith.cmpi eq, %arg1, %c0_i32_0 : i32
    %2 = arith.andi %0, %1 : i1
    %3 = arith.extui %2 : i1 to i32
    %c0_i32_1 = arith.constant 0 : i32
    %4 = arith.cmpi ne, %3, %c0_i32_1 : i32
    scf.if %4 {
      %c0_20 = arith.constant 0 : index
      %c0_21 = arith.constant 0 : index
      %36 = vector.load %arg3[%c0_20, %c0_21] : memref<128x128xf32, #tpu.memory_space<vmem>>, vector<128x128xf32>
      %c0_22 = arith.constant 0 : index
      %c0_23 = arith.constant 0 : index
      %c0_24 = arith.constant 0 : index
      %37 = vector.load %arg7[%c0_22, %c0_23, %c0_24] : memref<2x128x128xf32, #tpu.memory_space<vmem>>, vector<1x128x128xf32>
      %38 = vector.shape_cast %37 : vector<1x128x128xf32> to vector<128x128xf32>
      %39 = vector.shape_cast %36 : vector<128x128xf32> to vector<1x128x128xf32>
      tpu.vector_store %arg7[%c0_22, %c0_23, %c0_24], %39 {strides = array<i32>} : memref<2x128x128xf32, #tpu.memory_space<vmem>>, vector<1x128x128xf32>,
    } else {
    }
    %c2_i32 = arith.constant 2 : i32
    %c0_i32_2 = arith.constant 0 : i32
    %5 = arith.cmpi eq, %c2_i32, %c0_i32_2 : i32
    %c1_i32 = arith.constant 1 : i32
    %6 = arith.select %5, %c1_i32, %c2_i32 : i32
    %7 = arith.remsi %arg0, %6 : i32
    %c0_i32_3 = arith.constant 0 : i32
    %8 = arith.cmpi ne, %7, %c0_i32_3 : i32
    %c0_i32_4 = arith.constant 0 : i32
    %9 = arith.cmpi slt, %7, %c0_i32_4 : i32
    %c0_i32_5 = arith.constant 0 : i32
    %10 = arith.cmpi slt, %6, %c0_i32_5 : i32
    %11 = arith.xori %9, %10 : i1
    %12 = arith.andi %11, %8 : i1
    %13 = arith.addi %7, %6 : i32
    %14 = arith.select %12, %13, %7 : i32
    %c1_i32_6 = arith.constant 1 : i32
    %15 = arith.subi %c1_i32_6, %14 : i32
    %16 = arith.index_cast %14 : i32 to index
    %c0 = arith.constant 0 : index
    %c0_7 = arith.constant 0 : index
    %17 = vector.load %arg7[%16, %c0, %c0_7] : memref<2x128x128xf32, #tpu.memory_space<vmem>>, vector<1x128x128xf32>
    %18 = vector.shape_cast %17 : vector<1x128x128xf32> to vector<128x128xf32>
    %c0_8 = arith.constant 0 : index
    %c0_9 = arith.constant 0 : index
    %19 = vector.load %arg2[%c0_8, %c0_9] : memref<128x128xf32, #tpu.memory_space<vmem>>, vector<128x128xf32>
    %c0_10 = arith.constant 0 : index
    %c0_11 = arith.constant 0 : index
    %c0_12 = arith.constant 0 : index
    %20 = vector.load %arg4[%c0_10, %c0_11, %c0_12] : memref<1x128x128xf32, #tpu.memory_space<vmem>>, vector<1x128x128xf32>
    %21 = vector.shape_cast %20 : vector<1x128x128xf32> to vector<128x128xf32>
    %c0_13 = arith.constant 0 : index
    %c0_14 = arith.constant 0 : index
    %c0_15 = arith.constant 0 : index
    %22 = vector.load %arg5[%c0_13, %c0_14, %c0_15] : memref<1x1x128xf32, #tpu.memory_space<vmem>>, vector<1x1x128xf32>
    %23 = vector.shape_cast %22 : vector<1x1x128xf32> to vector<1x128xf32>
    %cst = arith.constant dense<0.000000e+00> : vector<128x128xf32>
    %24 = tpu.matmul %19, %18, %cst {dimension_numbers = #tpu.dot_dimension_numbers<[1], [0], [0], [1], [0, 0, 1, 1], [], []>} : vector<128x128xf32>, vector<128x128xf32>, vector<128x128xf32> -> vector<128x128xf32>
    %cst_16 = arith.constant dense<0.000000e+00> : vector<128x128xf32>
    %25 = tpu.matmul %24, %21, %cst_16 {dimension_numbers = #tpu.dot_dimension_numbers<[1], [0], [0], [1], [0, 0, 1, 1], [], []>} : vector<128x128xf32>, vector<128x128xf32>, vector<128x128xf32> -> vector<128x128xf32>
    %26 = vector.broadcast %23 : vector<1x128xf32> to vector<128x128xf32>
    %27 = arith.addf %25, %26 : vector<128x128xf32>
    %c2_i32_17 = arith.constant 2 : i32
    %28 = arith.cmpi eq, %arg0, %c2_i32_17 : i32
    %c128_i32 = arith.constant 128 : i32
    %29 = arith.muli %arg1, %c128_i32 : i32
    %30 = tpu.assume_multiple %29, 128 : i32
    %true = arith.constant true
    %31 = arith.xori %28, %true : i1
    %32 = arith.extui %31 : i1 to i32
    %c0_i32_18 = arith.constant 0 : i32
    %33 = arith.cmpi ne, %32, %c0_i32_18 : i32
    scf.if %33 {
      %cst_20 = arith.constant 0.000000e+00 : f32
      %36 = vector.broadcast %cst_20 : f32 to vector<128x128xf32>
      %37 = arith.maximumf %27, %36 : vector<128x128xf32>
      %c0_21 = arith.constant 0 : index
      %c0_22 = arith.constant 0 : index
      %38 = vector.load %arg6[%c0_21, %c0_22] : memref<128x128xf32, #tpu.memory_space<vmem>>, vector<128x128xf32>
      tpu.vector_store %arg6[%c0_21, %c0_22], %37 {strides = array<i32>} : memref<128x128xf32, #tpu.memory_space<vmem>>, vector<128x128xf32>,
      %c1_i32_23 = arith.constant 1 : i32
      %39 = arith.cmpi eq, %15, %c1_i32_23 : i32
      %40 = arith.extui %39 : i1 to i32
      %c0_i32_24 = arith.constant 0 : i32
      %41 = arith.cmpi ne, %40, %c0_i32_24 : i32
      scf.if %41 {
        %c1 = arith.constant 1 : index
        %45 = arith.index_cast %30 : i32 to index
        %c0_27 = arith.constant 0 : index
        %46 = vector.load %arg7[%c1, %45, %c0_27] : memref<2x128x128xf32, #tpu.memory_space<vmem>>, vector<1x128x128xf32>
        %47 = vector.shape_cast %46 : vector<1x128x128xf32> to vector<128x128xf32>
        %48 = vector.shape_cast %37 : vector<128x128xf32> to vector<1x128x128xf32>
        tpu.vector_store %arg7[%c1, %45, %c0_27], %48 {strides = array<i32>} : memref<2x128x128xf32, #tpu.memory_space<vmem>>, vector<1x128x128xf32>,
      } else {
      }
      %c0_i32_25 = arith.constant 0 : i32
      %42 = arith.cmpi eq, %15, %c0_i32_25 : i32
      %43 = arith.extui %42 : i1 to i32
      %c0_i32_26 = arith.constant 0 : i32
      %44 = arith.cmpi ne, %43, %c0_i32_26 : i32
      scf.if %44 {
        %c0_27 = arith.constant 0 : index
        %45 = arith.index_cast %30 : i32 to index
        %c0_28 = arith.constant 0 : index
        %46 = vector.load %arg7[%c0_27, %45, %c0_28] : memref<2x128x128xf32, #tpu.memory_space<vmem>>, vector<1x128x128xf32>
        %47 = vector.shape_cast %46 : vector<1x128x128xf32> to vector<128x128xf32>
        %48 = vector.shape_cast %37 : vector<128x128xf32> to vector<1x128x128xf32>
        tpu.vector_store %arg7[%c0_27, %45, %c0_28], %48 {strides = array<i32>} : memref<2x128x128xf32, #tpu.memory_space<vmem>>, vector<1x128x128xf32>,
      } else {
      }
    } else {
    }
    %34 = arith.extui %28 : i1 to i32
    %c0_i32_19 = arith.constant 0 : i32
    %35 = arith.cmpi ne, %34, %c0_i32_19 : i32
    scf.if %35 {
      %36 = tpu.iota {dimensions = array<i32: 1>} : vector<128x128xi32>
      %c8_i32 = arith.constant 8 : i32
      %37 = vector.broadcast %c8_i32 : i32 to vector<128x128xi32>
      %38 = arith.cmpi slt, %36, %37 : vector<128x128xi32>
      %cst_20 = arith.constant 0xFF800000 : f32
      %39 = vector.broadcast %cst_20 : f32 to vector<128x128xf32>
      %40 = arith.select %38, %27, %39 : vector<128x128xi1>, vector<128x128xf32>
      %cst_21 = arith.constant dense<0xFF800000> : vector<128xf32>
      %41 = vector.multi_reduction <maximumf>, %40, %cst_21 [1] : vector<128x128xf32> to vector<128xf32>
      %42 = vector.shape_cast %41 : vector<128xf32> to vector<128x1xf32>
      %43 = vector.broadcast %42 : vector<128x1xf32> to vector<128x128xf32>
      %44 = arith.subf %40, %43 : vector<128x128xf32>
      %45 = math.exp %44 : vector<128x128xf32>
      %cst_22 = arith.constant dense<0.000000e+00> : vector<128xf32>
      %46 = vector.multi_reduction <add>, %45, %cst_22 [1] : vector<128x128xf32> to vector<128xf32>
      %47 = vector.shape_cast %46 : vector<128xf32> to vector<128x1xf32>
      %48 = math.log %47 : vector<128x1xf32>
      %49 = vector.broadcast %48 : vector<128x1xf32> to vector<128x128xf32>
      %50 = arith.subf %44, %49 : vector<128x128xf32>
      %cst_23 = arith.constant 0.000000e+00 : f32
      %51 = vector.broadcast %cst_23 : f32 to vector<128x128xf32>
      %52 = arith.select %38, %50, %51 : vector<128x128xi1>, vector<128x128xf32>
      %c0_24 = arith.constant 0 : index
      %c0_25 = arith.constant 0 : index
      %53 = vector.load %arg6[%c0_24, %c0_25] : memref<128x128xf32, #tpu.memory_space<vmem>>, vector<128x128xf32>
      tpu.vector_store %arg6[%c0_24, %c0_25], %52 {strides = array<i32>} : memref<128x128xf32, #tpu.memory_space<vmem>>, vector<128x128xf32>,
    } else {
    }
    return
  }
  func.func @transform_0(%arg0: i32, %arg1: i32) -> (i32, i32) {
    %c0_i32 = arith.constant 0 : i32
    %c0_i32_0 = arith.constant 0 : i32
    return %arg1, %c0_i32 : i32, i32
  }
  func.func @transform_1(%arg0: i32, %arg1: i32) -> (i32, i32) {
    %c0_i32 = arith.constant 0 : i32
    %c0_i32_0 = arith.constant 0 : i32
    %c0_i32_1 = arith.constant 0 : i32
    return %c0_i32, %c0_i32_0 : i32, i32
  }
  func.func @transform_2(%arg0: i32, %arg1: i32) -> (i32, i32, i32) {
    %c0_i32 = arith.constant 0 : i32
    %c0_i32_0 = arith.constant 0 : i32
    %c0_i32_1 = arith.constant 0 : i32
    return %arg0, %c0_i32, %c0_i32_0 : i32, i32, i32
  }
  func.func @transform_3(%arg0: i32, %arg1: i32) -> (i32, i32, i32) {
    %c0_i32 = arith.constant 0 : i32
    %c0_i32_0 = arith.constant 0 : i32
    %c0_i32_1 = arith.constant 0 : i32
    return %arg0, %c0_i32, %c0_i32_0 : i32, i32, i32
  }
  func.func @transform_4(%arg0: i32, %arg1: i32) -> (i32, i32) {
    %c0_i32 = arith.constant 0 : i32
    %c0_i32_0 = arith.constant 0 : i32
    return %arg1, %c0_i32 : i32, i32
  }
}

</mosaic_0001>

<llo_original>
// kernel: tpu_custom_call.1
$region0: #{tpu_custom_call.1}
  #allocation0 [shape = 'u32[]', space=smem, size = 0x4, offset = 0x4, fixed_abs, tag = 'smem constant byte address 0x4 - core index']
  #allocation1 [shape = 'u32[144,128]{1,0:T(1,128)}', space=vmem, size = 0x12000, scoped, tag = 'internal scratch']
  #allocation2 [shape = 'f32[2,128,128]{2,1,0:T(8,128)}', space=vmem, size = 0x20000, scoped, tag = 'scratch operand']
  %s0 = inlined_call_operand.hbm [shape: f32[128,128], index: 0, kind: input, shape index: {}]
  %s1 = inlined_call_operand.hbm [shape: f32[128,128], index: 1, kind: input, shape index: {}]
  %s2 = inlined_call_operand.hbm [shape: f32[3,128,128], index: 2, kind: input, shape index: {}]
  %s3 = inlined_call_operand.hbm [shape: f32[3,1,128], index: 3, kind: input, shape index: {}]
  %s4 = inlined_call_operand.hbm [shape: f32[128,128], index: 4, kind: output, shape index: {}]
  %s5 = sld [smem:[#allocation0]]
  $region85: #{tpu_custom_call.1} parent=0
    _
  %s7 = ssub.s32 1, %s5
  %s8 = scalar_select 0, %s7, %s5
  $region1: #{tpu_custom_call.1} parent=0
    #allocation3 [shape = 'u8[65536]{0}', space=vmem, size = 0x10000, scoped, tag = 'input window, operand 0, single buffered']
    #allocation4 [shape = 's32[2]{0}', space=sflag, size = 0x8, scoped, tag = 'scoped memory for tpu_custom_call.1']
    #allocation5 [shape = 's32[2]{0}', space=sflag, size = 0x8, scoped, tag = 'scoped memory for tpu_custom_call.1']
    #allocation6 [shape = 'u8[65536]{0}', space=vmem, size = 0x10000, scoped, tag = 'input window, operand 1, single buffered']
    #allocation7 [shape = 's32[1]{0}', space=sflag, size = 0x4, scoped, tag = 'scoped memory for tpu_custom_call.1']
    #allocation8 [shape = 'u8[131072]{0}', space=vmem, size = 0x20000, scoped, tag = 'input window, operand 2']
    #allocation9 [shape = 'u8[1024]{0}', space=vmem, size = 0x400, scoped, tag = 'input window, operand 3']
    #allocation10 [shape = 'u8[65536]{0}', space=vmem, size = 0x10000, scoped, tag = 'output window, operand 0, single buffered']
    %9 = vsyncpa [#allocation4], 0
    %10 = vsyncpa [#allocation7], 0
    %11 = vsyncpa [#allocation5], 0
    loop: start=0, step=1, limit=5
    $region2: #{tpu_custom_call.1} parent=1 // loop_pre_header
      _
    $region3: #{tpu_custom_call.1} parent=1 // loop_header
      %s13 = sphi 0, %s17
      %p14 = scmp.ge.s32.totalorder %s13, 5
      %s20 = sphi 0, %s32
      %s21 = sphi 0, %s28
      %s22 = sphi 0, %s20
      %s23 = sphi 0, %s21
      %s24 = sphi 0, %s22
      %s25 = sphi 0, %s23
      %s35 = sphi 0, %s37
      %s38 = sphi 0, %s35
      %s39 = sphi 0, %s38
      %s55 = sphi 0, %s39
      %s59 = sphi 0, %s59
      %s61 = sphi 0, %s59
      %s62 = sphi 0, %s61
      %s76 = sphi 0, %s62
      %s82 = sphi 0, %s84
      %s85 = sphi 0, %s82
      %s86 = sphi 0, %s85
      %s102 = sphi 0, %s86
      %s108 = sphi 0, %s110
      %s111 = sphi 0, %s108
      %s112 = sphi 0, %s111
      %s128 = sphi 0, %s112
      %s134 = sphi 0, %s136
      %s137 = sphi 0, %s134
      %s138 = sphi 0, %s137
      %s154 = sphi 0, %s138
    $region4: #{tpu_custom_call.1} parent=1 // loop_header_branch
      %16 = sbr.rel (%p14) target = $region8
    $region5: #{tpu_custom_call.1} parent=1 // loop_body
      %s18 = ssub.s32 %s13, 1
      %s19 = ssub.s32 %s13, 2
      %s26 = sadd.s32 1, %s21
      %p27 = scmp.ge.s32.totalorder %s26, 1
      %s28 = scalar_select %p27, 0, %s26
      %s29 = sadd.s32 1, %s20
      %s30 = scalar_select %p27, %s29, %s20
      %p31 = scmp.ge.s32.totalorder %s30, 3
      %s32 = scalar_select %p31, 0, %s30
      %s33 = ssub.s32 %s21, %s28
      %p34 = scmp.eq.s32.totalorder %s33, 0
      %s36 = sadd.s32 %s35, 1
      %s37 = scalar_select %p34, %s35, %s36
      %p40 = pneg %p34
      %p41 = scmp.eq.s32.totalorder %s13, 2
      %p42 = por %p40, %p41
      %p43 = scmp.ne.s32.totalorder %s35, %s38
      %p44 = scmp.eq.s32.totalorder %s13, 0
      %p45 = por %p43, %p44
      %p46 = scmp.ne.s32.totalorder %s35, %s38
      %p47 = scmp.eq.s32.totalorder %s18, 2
      %p48 = por %p46, %p47
      %p49 = scmp.ne.s32.totalorder %s38, %s39
      %p50 = scmp.eq.s32.totalorder %s18, 0
      %p51 = por %p49, %p50
      %p52 = scmp.ne.s32.totalorder %s38, %s39
      %p53 = scmp.eq.s32.totalorder %s19, 2
      %p54 = por %p52, %p53
      %p56 = scmp.ne.s32.totalorder %s39, %s55
      %p57 = scmp.eq.s32.totalorder %s19, 0
      %p58 = por %p56, %p57
      %s60 = sadd.s32 %s59, 1
      %p63 = scmp.eq.s32.totalorder %s13, 2
      %p64 = scmp.ne.s32.totalorder %s59, %s61
      %p65 = scmp.eq.s32.totalorder %s13, 0
      %p66 = por %p64, %p65
      %p67 = scmp.ne.s32.totalorder %s59, %s61
      %p68 = scmp.eq.s32.totalorder %s18, 2
      %p69 = por %p67, %p68
      %p70 = scmp.ne.s32.totalorder %s61, %s62
      %p71 = scmp.eq.s32.totalorder %s18, 0
      %p72 = por %p70, %p71
      %p73 = scmp.ne.s32.totalorder %s61, %s62
      %p74 = scmp.eq.s32.totalorder %s19, 2
      %p75 = por %p73, %p74
      %p77 = scmp.ne.s32.totalorder %s62, %s76
      %p78 = scmp.eq.s32.totalorder %s19, 0
      %p79 = por %p77, %p78
      %s80 = ssub.s32 %s20, %s32
      %p81 = scmp.eq.s32.totalorder %s80, 0
      %s83 = sadd.s32 %s82, 1
      %s84 = scalar_select %p81, %s82, %s83
      %p87 = pneg %p81
      %p88 = scmp.eq.s32.totalorder %s13, 2
      %p89 = por %p87, %p88
      %p90 = scmp.ne.s32.totalorder %s82, %s85
      %p91 = scmp.eq.s32.totalorder %s13, 0
      %p92 = por %p90, %p91
      %p93 = scmp.ne.s32.totalorder %s82, %s85
      %p94 = scmp.eq.s32.totalorder %s18, 2
      %p95 = por %p93, %p94
      %p96 = scmp.ne.s32.totalorder %s85, %s86
      %p97 = scmp.eq.s32.totalorder %s18, 0
      %p98 = por %p96, %p97
      %p99 = scmp.ne.s32.totalorder %s85, %s86
      %p100 = scmp.eq.s32.totalorder %s19, 2
      %p101 = por %p99, %p100
      %p103 = scmp.ne.s32.totalorder %s86, %s102
      %p104 = scmp.eq.s32.totalorder %s19, 0
      %p105 = por %p103, %p104
      %s106 = ssub.s32 %s20, %s32
      %p107 = scmp.eq.s32.totalorder %s106, 0
      %s109 = sadd.s32 %s108, 1
      %s110 = scalar_select %p107, %s108, %s109
      %p113 = pneg %p107
      %p114 = scmp.eq.s32.totalorder %s13, 2
      %p115 = por %p113, %p114
      %p116 = scmp.ne.s32.totalorder %s108, %s111
      %p117 = scmp.eq.s32.totalorder %s13, 0
      %p118 = por %p116, %p117
      %p119 = scmp.ne.s32.totalorder %s108, %s111
      %p120 = scmp.eq.s32.totalorder %s18, 2
      %p121 = por %p119, %p120
      %p122 = scmp.ne.s32.totalorder %s111, %s112
      %p123 = scmp.eq.s32.totalorder %s18, 0
      %p124 = por %p122, %p123
      %p125 = scmp.ne.s32.totalorder %s111, %s112
      %p126 = scmp.eq.s32.totalorder %s19, 2
      %p127 = por %p125, %p126
      %p129 = scmp.ne.s32.totalorder %s112, %s128
      %p130 = scmp.eq.s32.totalorder %s19, 0
      %p131 = por %p129, %p130
      %s132 = ssub.s32 %s21, %s28
      %p133 = scmp.eq.s32.totalorder %s132, 0
      %s135 = sadd.s32 %s134, 1
      %s136 = scalar_select %p133, %s134, %s135
      %p139 = pneg %p133
      %p140 = scmp.eq.s32.totalorder %s13, 2
      %p141 = por %p139, %p140
      %p142 = scmp.ne.s32.totalorder %s134, %s137
      %p143 = scmp.eq.s32.totalorder %s13, 0
      %p144 = por %p142, %p143
      %p145 = scmp.ne.s32.totalorder %s134, %s137
      %p146 = scmp.eq.s32.totalorder %s18, 2
      %p147 = por %p145, %p146
      %p148 = scmp.ne.s32.totalorder %s137, %s138
      %p149 = scmp.eq.s32.totalorder %s18, 0
      %p150 = por %p148, %p149
      %p151 = scmp.ne.s32.totalorder %s137, %s138
      %p152 = scmp.eq.s32.totalorder %s19, 2
      %p153 = por %p151, %p152
      %p155 = scmp.ne.s32.totalorder %s138, %s154
      %p156 = scmp.eq.s32.totalorder %s19, 0
      %p157 = por %p155, %p156
      %p158 = scmp.le.s32.totalorder 1, %s13
      %p159 = scmp.lt.s32.totalorder %s13, 4
      %p160 = pnand %p158, %p159
      %p161 = pneg %p160
      // Predicated region
      $region9: #{tpu_custom_call.1} parent=5 // pred_check
        _
      $region10: #{tpu_custom_call.1} parent=5 // pred_check_branch
        %163 = sbr.rel (%p160) target = $region12
      $region11: #{tpu_custom_call.1} parent=5 // pred_region
        %s164 = ssub.s32 %s13, 1
        // Predicated region
        $region13: #{tpu_custom_call.1} parent=11 // pred_check
          %p165 = pneg %p51
        $region14: #{tpu_custom_call.1} parent=11 // pred_check_branch
          %167 = sbr.rel (%p165) target = $region16
        $region15: #{tpu_custom_call.1} parent=11 // pred_region
          %s168 = smul.u32 16, %s23
          %s170 = ssub.s32 2048, 2048
          %171 = vsyncadd [#allocation4], %s170
          %s172 = smul.addr %s168, 128
          %s173 = scalar_lea.hbm %s0, %s172
          %s174 = sshll.u32 [#allocation3], 4
          %s175 = int_to_ptr.vmem [resolvable:$true] %s174
          %180 = dma.hbm_to_vmem [thread:$0]  %s173, 2048, %s175, [#allocation4], 128, 128, 8
        $region16: #{tpu_custom_call.1} parent=11 // pred_fallthru
          _
        // Predicated region
        $region17: #{tpu_custom_call.1} parent=11 // pred_check
          %p181 = pneg %p72
        $region18: #{tpu_custom_call.1} parent=11 // pred_check_branch
          %183 = sbr.rel (%p181) target = $region20
        $region19: #{tpu_custom_call.1} parent=11 // pred_region
          %s185 = ssub.s32 2048, 2048
          %186 = vsyncadd [#allocation7], %s185
          %s187 = sshll.u32 [#allocation6], 4
          %s188 = int_to_ptr.vmem [resolvable:$true] %s187
          %193 = dma.hbm_to_vmem [thread:$0]  %s1, 2048, %s188, [#allocation7], 128, 128, 8
        $region20: #{tpu_custom_call.1} parent=11 // pred_fallthru
          _
      $region12: #{tpu_custom_call.1} parent=5 // pred_fallthru
        _
      %p194 = scmp.lt.s32.totalorder %s13, 3
      // Predicated region
      $region21: #{tpu_custom_call.1} parent=5 // pred_check
        %p195 = pneg %p194
      $region22: #{tpu_custom_call.1} parent=5 // pred_check_branch
        %197 = sbr.rel (%p195) target = $region24
      $region23: #{tpu_custom_call.1} parent=5 // pred_region
        // Predicated region
        $region25: #{tpu_custom_call.1} parent=23 // pred_check
          %p198 = pneg %p92
        $region26: #{tpu_custom_call.1} parent=23 // pred_check_branch
          %200 = sbr.rel (%p198) target = $region28
        $region27: #{tpu_custom_call.1} parent=23 // pred_region
          %s201 = sand.u32 %s13, 1
          %s202 = scalar_lea.sflag [#allocation4], %s201
          %s203 = sand.u32 %s82, 1
          %s204 = smul.addr %s203, 128
          %s205 = scalar_lea.vmem [#allocation8], %s204
          %s207 = ssub.s32 2048, 2048
          %208 = vsyncadd %s202, %s207
          %s209 = smul.addr %s20, 16
          %s210 = smul.addr %s209, 128
          %s211 = scalar_lea.hbm %s2, %s210
          %s212 = sshll.u32 %s205, 4
          %s213 = int_to_ptr.vmem [resolvable:$true] %s212
          %218 = dma.hbm_to_vmem [thread:$0]  %s211, 2048, %s213, %s202, 128, 128, 8
        $region28: #{tpu_custom_call.1} parent=23 // pred_fallthru
          _
        // Predicated region
        $region29: #{tpu_custom_call.1} parent=23 // pred_check
          %p219 = pneg %p118
        $region30: #{tpu_custom_call.1} parent=23 // pred_check_branch
          %221 = sbr.rel (%p219) target = $region32
        $region31: #{tpu_custom_call.1} parent=23 // pred_region
          %s222 = sand.u32 %s13, 1
          %s223 = scalar_lea.sflag [#allocation4], %s222
          %s224 = sand.u32 %s108, 1
          %s225 = scalar_lea.vmem [#allocation9], %s224
          %s227 = ssub.s32 16, 16
          %228 = vsyncadd %s223, %s227
          %s229 = smul.addr %s20, 16
          %s230 = scalar_lea.hbm %s3, %s229
          %s232 = sshll.u32 %s225, 4
          %s233 = int_to_ptr.vmem [resolvable:$true] %s232
          %235 = dma.hbm_to_vmem [thread:$0]  %s230, 16, %s233, %s223
        $region32: #{tpu_custom_call.1} parent=23 // pred_fallthru
          _
      $region24: #{tpu_custom_call.1} parent=5 // pred_fallthru
        _
      %p236 = scmp.le.s32.totalorder 1, %s13
      %p237 = scmp.lt.s32.totalorder %s13, 4
      %p238 = pnand %p236, %p237
      %p239 = pneg %p238
      // Predicated region
      $region33: #{tpu_custom_call.1} parent=5 // pred_check
        _
      $region34: #{tpu_custom_call.1} parent=5 // pred_check_branch
        %241 = sbr.rel (%p238) target = $region36
      $region35: #{tpu_custom_call.1} parent=5 // pred_region
        %s242 = ssub.s32 %s13, 1
        // Predicated region
        $region37: #{tpu_custom_call.1} parent=35 // pred_check
          %p243 = pneg %p51
        $region38: #{tpu_custom_call.1} parent=35 // pred_check_branch
          %245 = sbr.rel (%p243) target = $region40
        $region39: #{tpu_custom_call.1} parent=35 // pred_region
          %246 = dma.done [#allocation4], 2048
        $region40: #{tpu_custom_call.1} parent=35 // pred_fallthru
          _
        // Predicated region
        $region41: #{tpu_custom_call.1} parent=35 // pred_check
          %p247 = pneg %p72
        $region42: #{tpu_custom_call.1} parent=35 // pred_check_branch
          %249 = sbr.rel (%p247) target = $region44
        $region43: #{tpu_custom_call.1} parent=35 // pred_region
          %250 = dma.done [#allocation7], 2048
        $region44: #{tpu_custom_call.1} parent=35 // pred_fallthru
          _
        %s251 = sand.u32 %s18, 1
        %s252 = scalar_lea.sflag [#allocation4], %s251
        %s253 = sand.u32 %s85, 1
        %s254 = smul.addr %s253, 128
        %s255 = scalar_lea.vmem [#allocation8], %s254
        // Predicated region
        $region45: #{tpu_custom_call.1} parent=35 // pred_check
          %p256 = pneg %p98
        $region46: #{tpu_custom_call.1} parent=35 // pred_check_branch
          %258 = sbr.rel (%p256) target = $region48
        $region47: #{tpu_custom_call.1} parent=35 // pred_region
          %259 = dma.done %s252, 2048
        $region48: #{tpu_custom_call.1} parent=35 // pred_fallthru
          _
        %s260 = sand.u32 %s18, 1
        %s261 = scalar_lea.sflag [#allocation4], %s260
        %s262 = sand.u32 %s111, 1
        %s263 = scalar_lea.vmem [#allocation9], %s262
        // Predicated region
        $region49: #{tpu_custom_call.1} parent=35 // pred_check
          %p264 = pneg %p124
        $region50: #{tpu_custom_call.1} parent=35 // pred_check_branch
          %266 = sbr.rel (%p264) target = $region52
        $region51: #{tpu_custom_call.1} parent=35 // pred_region
          %267 = dma.done %s261, 16
        $region52: #{tpu_custom_call.1} parent=35 // pred_fallthru
          _
        %p268 = pneg %p51
        %p269 = pneg %p48
        %p270 = pneg %p72
        %p271 = pneg %p69
        %s272 = sand.u32 %s18, 1
        %s273 = scalar_lea.sflag [#allocation4], %s272
        %s274 = sand.u32 %s85, 1
        %s275 = smul.addr %s274, 128
        %s276 = scalar_lea.vmem [#allocation8], %s275
        %p277 = pneg %p98
        %p278 = pneg %p95
        %s279 = sand.u32 %s18, 1
        %s280 = scalar_lea.sflag [#allocation4], %s279
        %s281 = sand.u32 %s111, 1
        %s282 = scalar_lea.vmem [#allocation9], %s281
        %p283 = pneg %p124
        %p284 = pneg %p121
        %p285 = pneg %p150
        %p286 = pneg %p147
        %s287 = smul.u32 16, %s23
        %s288 = smul.u32 16, %s23
        %p289 = scmp.eq.s32.totalorder %s22, 0
        %p290 = scmp.eq.s32.totalorder %s23, 0
        %p291 = pnand %p289, %p290
        %p292 = pneg %p291
        // Predicated region
        $region53: #{tpu_custom_call.1} parent=35 // pred_check
          _
        $region54: #{tpu_custom_call.1} parent=35 // pred_check_branch
          %294 = sbr.rel (%p291) target = $region56
        $region55: #{tpu_custom_call.1} parent=35 // pred_region
          %v295 = vld [vmem:[#allocation6] sm:$0xff]
          %v296 = vld [vmem:[#allocation6 + $0x8] sm:$0xff]
          %v297 = vld [vmem:[#allocation6 + $0x10] sm:$0xff]
          %v298 = vld [vmem:[#allocation6 + $0x18] sm:$0xff]
          %v299 = vld [vmem:[#allocation6 + $0x20] sm:$0xff]
          %v300 = vld [vmem:[#allocation6 + $0x28] sm:$0xff]
          %v301 = vld [vmem:[#allocation6 + $0x30] sm:$0xff]
          %v302 = vld [vmem:[#allocation6 + $0x38] sm:$0xff]
          %v303 = vld [vmem:[#allocation6 + $0x40] sm:$0xff]
          %v304 = vld [vmem:[#allocation6 + $0x48] sm:$0xff]
          %v305 = vld [vmem:[#allocation6 + $0x50] sm:$0xff]
          %v306 = vld [vmem:[#allocation6 + $0x58] sm:$0xff]
          %v307 = vld [vmem:[#allocation6 + $0x60] sm:$0xff]
          %v308 = vld [vmem:[#allocation6 + $0x68] sm:$0xff]
          %v309 = vld [vmem:[#allocation6 + $0x70] sm:$0xff]
          %v310 = vld [vmem:[#allocation6 + $0x78] sm:$0xff]
          %311 = vst [vmem:[#allocation2] sm:$0xff] %v295
          %312 = vst [vmem:[#allocation2 + $0x8] sm:$0xff] %v296
          %313 = vst [vmem:[#allocation2 + $0x10] sm:$0xff] %v297
          %314 = vst [vmem:[#allocation2 + $0x18] sm:$0xff] %v298
          %315 = vst [vmem:[#allocation2 + $0x20] sm:$0xff] %v299
          %316 = vst [vmem:[#allocation2 + $0x28] sm:$0xff] %v300
          %317 = vst [vmem:[#allocation2 + $0x30] sm:$0xff] %v301
          %318 = vst [vmem:[#allocation2 + $0x38] sm:$0xff] %v302
          %319 = vst [vmem:[#allocation2 + $0x40] sm:$0xff] %v303
          %320 = vst [vmem:[#allocation2 + $0x48] sm:$0xff] %v304
          %321 = vst [vmem:[#allocation2 + $0x50] sm:$0xff] %v305
          %322 = vst [vmem:[#allocation2 + $0x58] sm:$0xff] %v306
          %323 = vst [vmem:[#allocation2 + $0x60] sm:$0xff] %v307
          %324 = vst [vmem:[#allocation2 + $0x68] sm:$0xff] %v308
          %325 = vst [vmem:[#allocation2 + $0x70] sm:$0xff] %v309
          %326 = vst [vmem:[#allocation2 + $0x78] sm:$0xff] %v310
        $region56: #{tpu_custom_call.1} parent=35 // pred_fallthru
          _
        %p327 = scmp.lt.s32.totalorder %s22, 0
        %s328 = ssub.s32 0, %s22
        %s329 = scalar_select %p327, %s328, %s22
        %s330 = sand.u32 %s329, 1
        %s331 = ssub.s32 0, %s330
        %s332 = scalar_select %p327, %s331, %s330
        %p333 = scmp.ne.s32.totalorder %s332, 0
        %p334 = scmp.lt.s32.totalorder %s332, 0
        %p335 = pnand %p334, %p333
        %p336 = pneg %p335
        %s337 = sadd.s32 %s332, 2
        %s338 = scalar_select %p336, %s337, %s332
        %s339 = ssub.s32 1, %s338
        %s340 = smul.u32 %s338, 128
        %s341 = scalar_lea.vmem [#allocation2], %s340
        %v342 = vld [vmem:[%s341] sm:$0xff]
        %v343 = vld [vmem:[%s341 + $0x8] sm:$0xff]
        %v344 = vld [vmem:[%s341 + $0x10] sm:$0xff]
        %v345 = vld [vmem:[%s341 + $0x18] sm:$0xff]
        %v346 = vld [vmem:[%s341 + $0x20] sm:$0xff]
        %v347 = vld [vmem:[%s341 + $0x28] sm:$0xff]
        %v348 = vld [vmem:[%s341 + $0x30] sm:$0xff]
        %v349 = vld [vmem:[%s341 + $0x38] sm:$0xff]
        %v350 = vld [vmem:[%s341 + $0x40] sm:$0xff]
        %v351 = vld [vmem:[%s341 + $0x48] sm:$0xff]
        %v352 = vld [vmem:[%s341 + $0x50] sm:$0xff]
        %v353 = vld [vmem:[%s341 + $0x58] sm:$0xff]
        %v354 = vld [vmem:[%s341 + $0x60] sm:$0xff]
        %v355 = vld [vmem:[%s341 + $0x68] sm:$0xff]
        %v356 = vld [vmem:[%s341 + $0x70] sm:$0xff]
        %v357 = vld [vmem:[%s341 + $0x78] sm:$0xff]
        %v358 = vld [vmem:[#allocation3] sm:$0xff]
        %v359 = vld [vmem:[#allocation3 + $0x8] sm:$0xff]
        %v360 = vld [vmem:[#allocation3 + $0x10] sm:$0xff]
        %v361 = vld [vmem:[#allocation3 + $0x18] sm:$0xff]
        %v362 = vld [vmem:[#allocation3 + $0x20] sm:$0xff]
        %v363 = vld [vmem:[#allocation3 + $0x28] sm:$0xff]
        %v364 = vld [vmem:[#allocation3 + $0x30] sm:$0xff]
        %v365 = vld [vmem:[#allocation3 + $0x38] sm:$0xff]
        %v366 = vld [vmem:[#allocation3 + $0x40] sm:$0xff]
        %v367 = vld [vmem:[#allocation3 + $0x48] sm:$0xff]
        %v368 = vld [vmem:[#allocation3 + $0x50] sm:$0xff]
        %v369 = vld [vmem:[#allocation3 + $0x58] sm:$0xff]
        %v370 = vld [vmem:[#allocation3 + $0x60] sm:$0xff]
        %v371 = vld [vmem:[#allocation3 + $0x68] sm:$0xff]
        %v372 = vld [vmem:[#allocation3 + $0x70] sm:$0xff]
        %v373 = vld [vmem:[#allocation3 + $0x78] sm:$0xff]
        %v374 = vld [vmem:[%s255] sm:$0xff]
        %v375 = vld [vmem:[%s255 + $0x8] sm:$0xff]
        %v376 = vld [vmem:[%s255 + $0x10] sm:$0xff]
        %v377 = vld [vmem:[%s255 + $0x18] sm:$0xff]
        %v378 = vld [vmem:[%s255 + $0x20] sm:$0xff]
        %v379 = vld [vmem:[%s255 + $0x28] sm:$0xff]
        %v380 = vld [vmem:[%s255 + $0x30] sm:$0xff]
        %v381 = vld [vmem:[%s255 + $0x38] sm:$0xff]
        %v382 = vld [vmem:[%s255 + $0x40] sm:$0xff]
        %v383 = vld [vmem:[%s255 + $0x48] sm:$0xff]
        %v384 = vld [vmem:[%s255 + $0x50] sm:$0xff]
        %v385 = vld [vmem:[%s255 + $0x58] sm:$0xff]
        %v386 = vld [vmem:[%s255 + $0x60] sm:$0xff]
        %v387 = vld [vmem:[%s255 + $0x68] sm:$0xff]
        %v388 = vld [vmem:[%s255 + $0x70] sm:$0xff]
        %v389 = vld [vmem:[%s255 + $0x78] sm:$0xff]
        %v390 = vld [vmem:[%s263] sm:$0x1]
        %391 = vmatprep.subr.mxu0 0.0
        %392 = vmatpush1.msra.mxu0 %v342
        %393 = vmatprep.subr.mxu0 0.0
        %394 = vmatpush1.msra.mxu0 %v343
        %395 = vmatprep.subr.mxu0 0.0
        %396 = vmatpush1.msra.mxu0 %v344
        %397 = vmatprep.subr.mxu0 0.0
        %398 = vmatpush1.msra.mxu0 %v345
        %399 = vmatprep.subr.mxu0 0.0
        %400 = vmatpush1.msra.mxu0 %v346
        %401 = vmatprep.subr.mxu0 0.0
        %402 = vmatpush1.msra.mxu0 %v347
        %403 = vmatprep.subr.mxu0 0.0
        %404 = vmatpush1.msra.mxu0 %v348
        %405 = vmatprep.subr.mxu0 0.0
        %406 = vmatpush1.msra.mxu0 %v349
        %407 = vmatprep.subr.mxu0 0.0
        %408 = vmatpush1.msra.mxu0 %v350
        %409 = vmatprep.subr.mxu0 0.0
        %410 = vmatpush1.msra.mxu0 %v351
        %411 = vmatprep.subr.mxu0 0.0
        %412 = vmatpush1.msra.mxu0 %v352
        %413 = vmatprep.subr.mxu0 0.0
        %414 = vmatpush1.msra.mxu0 %v353
        %415 = vmatprep.subr.mxu0 0.0
        %416 = vmatpush1.msra.mxu0 %v354
        %417 = vmatprep.subr.mxu0 0.0
        %418 = vmatpush1.msra.mxu0 %v355
        %419 = vmatprep.subr.mxu0 0.0
        %420 = vmatpush1.msra.mxu0 %v356
        %421 = vmatprep.subr.mxu0 0.0
        %422 = vmatpush1.msra.mxu0 %v357
        %423 = vmatprep.subr.mxu0 0.0
        %424 = vmatpush1.msra.mxu0 0.0
        %425 = vmatprep.subr.mxu0 0.0
        %426 = vmatpush1.msra.mxu0 0.0
        %427 = vmatprep.subr.mxu0 0.0
        %428 = vmatpush1.msra.mxu0 0.0
        %429 = vmatprep.subr.mxu0 0.0
        %430 = vmatpush1.msra.mxu0 0.0
        %431 = vmatprep.subr.mxu0 0.0
        %432 = vmatpush1.msra.mxu0 0.0
        %433 = vmatprep.subr.mxu0 0.0
        %434 = vmatpush1.msra.mxu0 0.0
        %435 = vmatprep.subr.mxu0 0.0
        %436 = vmatpush1.msra.mxu0 0.0
        %437 = vmatprep.subr.mxu0 0.0
        %438 = vmatpush1.msra.mxu0 0.0
        %439 = vmatprep.subr.mxu0 0.0
        %440 = vmatpush1.msra.mxu0 0.0
        %441 = vmatprep.subr.mxu0 0.0
        %442 = vmatpush1.msra.mxu0 0.0
        %443 = vmatprep.subr.mxu0 0.0
        %444 = vmatpush1.msra.mxu0 0.0
        %445 = vmatprep.subr.mxu0 0.0
        %446 = vmatpush1.msra.mxu0 0.0
        %447 = vmatprep.subr.mxu0 0.0
        %448 = vmatpush1.msra.mxu0 0.0
        %449 = vmatprep.subr.mxu0 0.0
        %450 = vmatpush1.msra.mxu0 0.0
        %451 = vmatprep.subr.mxu0 0.0
        %452 = vmatpush1.msra.mxu0 0.0
        %453 = vmatprep.subr.mxu0 0.0
        %454 = vmatpush1.msra.mxu0 0.0
        %455 = vmatprep.mubr.f32.mxu0 0.0
        %456 = vmatmul.mubr.f32.gmra.mrb[0].mxu0 %v358
        %v457 = vpop.f32.mrb[0].mxu0
        %v458 = vadd.f32 0.0, %v457
        %v459 = vpop.f32.mrb[0].mxu0
        %460 = vmatprep.mubr.f32.mxu0 0.0
        %461 = vmatmul.mubr.f32.gmra.mrb[0].mxu0 %v359
        %v462 = vpop.f32.mrb[0].mxu0
        %v463 = vadd.f32 0.0, %v462
        %v464 = vpop.f32.mrb[0].mxu0
        %465 = vmatprep.mubr.f32.mxu0 0.0
        %466 = vmatmul.mubr.f32.gmra.mrb[0].mxu0 %v360
        %v467 = vpop.f32.mrb[0].mxu0
        %v468 = vadd.f32 0.0, %v467
        %v469 = vpop.f32.mrb[0].mxu0
        %470 = vmatprep.mubr.f32.mxu0 0.0
        %471 = vmatmul.mubr.f32.gmra.mrb[0].mxu0 %v361
        %v472 = vpop.f32.mrb[0].mxu0
        %v473 = vadd.f32 0.0, %v472
        %v474 = vpop.f32.mrb[0].mxu0
        %475 = vmatprep.mubr.f32.mxu0 0.0
        %476 = vmatmul.mubr.f32.gmra.mrb[0].mxu0 %v362
        %v477 = vpop.f32.mrb[0].mxu0
        %v478 = vadd.f32 0.0, %v477
        %v479 = vpop.f32.mrb[0].mxu0
        %480 = vmatprep.mubr.f32.mxu0 0.0
        %481 = vmatmul.mubr.f32.gmra.mrb[0].mxu0 %v363
        %v482 = vpop.f32.mrb[0].mxu0
        %v483 = vadd.f32 0.0, %v482
        %v484 = vpop.f32.mrb[0].mxu0
        %485 = vmatprep.mubr.f32.mxu0 0.0
        %486 = vmatmul.mubr.f32.gmra.mrb[0].mxu0 %v364
        %v487 = vpop.f32.mrb[0].mxu0
        %v488 = vadd.f32 0.0, %v487
        %v489 = vpop.f32.mrb[0].mxu0
        %490 = vmatprep.mubr.f32.mxu0 0.0
        %491 = vmatmul.mubr.f32.gmra.mrb[0].mxu0 %v365
        %v492 = vpop.f32.mrb[0].mxu0
        %v493 = vadd.f32 0.0, %v492
        %v494 = vpop.f32.mrb[0].mxu0
        %495 = vmatprep.mubr.f32.mxu0 0.0
        %496 = vmatmul.mubr.f32.gmra.mrb[0].mxu0 %v366
        %v497 = vpop.f32.mrb[0].mxu0
        %v498 = vadd.f32 0.0, %v497
        %v499 = vpop.f32.mrb[0].mxu0
        %500 = vmatprep.mubr.f32.mxu0 0.0
        %501 = vmatmul.mubr.f32.gmra.mrb[0].mxu0 %v367
        %v502 = vpop.f32.mrb[0].mxu0
        %v503 = vadd.f32 0.0, %v502
        %v504 = vpop.f32.mrb[0].mxu0
        %505 = vmatprep.mubr.f32.mxu0 0.0
        %506 = vmatmul.mubr.f32.gmra.mrb[0].mxu0 %v368
        %v507 = vpop.f32.mrb[0].mxu0
        %v508 = vadd.f32 0.0, %v507
        %v509 = vpop.f32.mrb[0].mxu0
        %510 = vmatprep.mubr.f32.mxu0 0.0
        %511 = vmatmul.mubr.f32.gmra.mrb[0].mxu0 %v369
        %v512 = vpop.f32.mrb[0].mxu0
        %v513 = vadd.f32 0.0, %v512
        %v514 = vpop.f32.mrb[0].mxu0
        %515 = vmatprep.mubr.f32.mxu0 0.0
        %516 = vmatmul.mubr.f32.gmra.mrb[0].mxu0 %v370
        %v517 = vpop.f32.mrb[0].mxu0
        %v518 = vadd.f32 0.0, %v517
        %v519 = vpop.f32.mrb[0].mxu0
        %520 = vmatprep.mubr.f32.mxu0 0.0
        %521 = vmatmul.mubr.f32.gmra.mrb[0].mxu0 %v371
        %v522 = vpop.f32.mrb[0].mxu0
        %v523 = vadd.f32 0.0, %v522
        %v524 = vpop.f32.mrb[0].mxu0
        %525 = vmatprep.mubr.f32.mxu0 0.0
        %526 = vmatmul.mubr.f32.gmra.mrb[0].mxu0 %v372
        %v527 = vpop.f32.mrb[0].mxu0
        %v528 = vadd.f32 0.0, %v527
        %v529 = vpop.f32.mrb[0].mxu0
        %530 = vmatprep.mubr.f32.mxu0 0.0
        %531 = vmatmul.mubr.f32.gmra.mrb[0].mxu0 %v373
        %v532 = vpop.f32.mrb[0].mxu0
        %v533 = vadd.f32 0.0, %v532
        %v534 = vpop.f32.mrb[0].mxu0
        %535 = vdwg.mxu0
        %v537 = vlaneseq
        %v538 = vshrl.u32 %v537, 7
        %v539 = vsub.s32 0, %v538
        %v540 = vrot.slane %v390, %v539
        %542 = vmatprep.subr.mxu0 0.0
        %543 = vmatpush1.msra.mxu0 %v374
        %544 = vmatprep.subr.mxu0 0.0
        %545 = vmatpush1.msra.mxu0 %v375
        %546 = vmatprep.subr.mxu0 0.0
        %547 = vmatpush1.msra.mxu0 %v376
        %548 = vmatprep.subr.mxu0 0.0
        %549 = vmatpush1.msra.mxu0 %v377
        %550 = vmatprep.subr.mxu0 0.0
        %551 = vmatpush1.msra.mxu0 %v378
        %552 = vmatprep.subr.mxu0 0.0
        %553 = vmatpush1.msra.mxu0 %v379
        %554 = vmatprep.subr.mxu0 0.0
        %555 = vmatpush1.msra.mxu0 %v380
        %556 = vmatprep.subr.mxu0 0.0
        %557 = vmatpush1.msra.mxu0 %v381
        %558 = vmatprep.subr.mxu0 0.0
        %559 = vmatpush1.msra.mxu0 %v382
        %560 = vmatprep.subr.mxu0 0.0
        %561 = vmatpush1.msra.mxu0 %v383
        %562 = vmatprep.subr.mxu0 0.0
        %563 = vmatpush1.msra.mxu0 %v384
        %564 = vmatprep.subr.mxu0 0.0
        %565 = vmatpush1.msra.mxu0 %v385
        %566 = vmatprep.subr.mxu0 0.0
        %567 = vmatpush1.msra.mxu0 %v386
        %568 = vmatprep.subr.mxu0 0.0
        %569 = vmatpush1.msra.mxu0 %v387
        %570 = vmatprep.subr.mxu0 0.0
        %571 = vmatpush1.msra.mxu0 %v388
        %572 = vmatprep.subr.mxu0 0.0
        %573 = vmatpush1.msra.mxu0 %v389
        %574 = vmatprep.subr.mxu0 0.0
        %575 = vmatpush1.msra.mxu0 0.0
        %576 = vmatprep.subr.mxu0 0.0
        %577 = vmatpush1.msra.mxu0 0.0
        %578 = vmatprep.subr.mxu0 0.0
        %579 = vmatpush1.msra.mxu0 0.0
        %580 = vmatprep.subr.mxu0 0.0
        %581 = vmatpush1.msra.mxu0 0.0
        %582 = vmatprep.subr.mxu0 0.0
        %583 = vmatpush1.msra.mxu0 0.0
        %584 = vmatprep.subr.mxu0 0.0
        %585 = vmatpush1.msra.mxu0 0.0
        %586 = vmatprep.subr.mxu0 0.0
        %587 = vmatpush1.msra.mxu0 0.0
        %588 = vmatprep.subr.mxu0 0.0
        %589 = vmatpush1.msra.mxu0 0.0
        %590 = vmatprep.subr.mxu0 0.0
        %591 = vmatpush1.msra.mxu0 0.0
        %592 = vmatprep.subr.mxu0 0.0
        %593 = vmatpush1.msra.mxu0 0.0
        %594 = vmatprep.subr.mxu0 0.0
        %595 = vmatpush1.msra.mxu0 0.0
        %596 = vmatprep.subr.mxu0 0.0
        %597 = vmatpush1.msra.mxu0 0.0
        %598 = vmatprep.subr.mxu0 0.0
        %599 = vmatpush1.msra.mxu0 0.0
        %600 = vmatprep.subr.mxu0 0.0
        %601 = vmatpush1.msra.mxu0 0.0
        %602 = vmatprep.subr.mxu0 0.0
        %603 = vmatpush1.msra.mxu0 0.0
        %604 = vmatprep.subr.mxu0 0.0
        %605 = vmatpush1.msra.mxu0 0.0
        %606 = vmatprep.mubr.f32.mxu0 0.0
        %607 = vmatmul.mubr.f32.gmra.mrb[0].mxu0 %v458
        %v608 = vpop.f32.mrb[0].mxu0
        %v609 = vadd.f32 %v540, %v608
        %v610 = vpop.f32.mrb[0].mxu0
        %611 = vmatprep.mubr.f32.mxu0 0.0
        %612 = vmatmul.mubr.f32.gmra.mrb[0].mxu0 %v463
        %v613 = vpop.f32.mrb[0].mxu0
        %v614 = vadd.f32 %v540, %v613
        %v615 = vpop.f32.mrb[0].mxu0
        %616 = vmatprep.mubr.f32.mxu0 0.0
        %617 = vmatmul.mubr.f32.gmra.mrb[0].mxu0 %v468
        %v618 = vpop.f32.mrb[0].mxu0
        %v619 = vadd.f32 %v540, %v618
        %v620 = vpop.f32.mrb[0].mxu0
        %621 = vmatprep.mubr.f32.mxu0 0.0
        %622 = vmatmul.mubr.f32.gmra.mrb[0].mxu0 %v473
        %v623 = vpop.f32.mrb[0].mxu0
        %v624 = vadd.f32 %v540, %v623
        %v625 = vpop.f32.mrb[0].mxu0
        %626 = vmatprep.mubr.f32.mxu0 0.0
        %627 = vmatmul.mubr.f32.gmra.mrb[0].mxu0 %v478
        %v628 = vpop.f32.mrb[0].mxu0
        %v629 = vadd.f32 %v540, %v628
        %v630 = vpop.f32.mrb[0].mxu0
        %631 = vmatprep.mubr.f32.mxu0 0.0
        %632 = vmatmul.mubr.f32.gmra.mrb[0].mxu0 %v483
        %v633 = vpop.f32.mrb[0].mxu0
        %v634 = vadd.f32 %v540, %v633
        %v635 = vpop.f32.mrb[0].mxu0
        %636 = vmatprep.mubr.f32.mxu0 0.0
        %637 = vmatmul.mubr.f32.gmra.mrb[0].mxu0 %v488
        %v638 = vpop.f32.mrb[0].mxu0
        %v639 = vadd.f32 %v540, %v638
        %v640 = vpop.f32.mrb[0].mxu0
        %641 = vmatprep.mubr.f32.mxu0 0.0
        %642 = vmatmul.mubr.f32.gmra.mrb[0].mxu0 %v493
        %v643 = vpop.f32.mrb[0].mxu0
        %v644 = vadd.f32 %v540, %v643
        %v645 = vpop.f32.mrb[0].mxu0
        %646 = vmatprep.mubr.f32.mxu0 0.0
        %647 = vmatmul.mubr.f32.gmra.mrb[0].mxu0 %v498
        %v648 = vpop.f32.mrb[0].mxu0
        %v649 = vadd.f32 %v540, %v648
        %v650 = vpop.f32.mrb[0].mxu0
        %651 = vmatprep.mubr.f32.mxu0 0.0
        %652 = vmatmul.mubr.f32.gmra.mrb[0].mxu0 %v503
        %v653 = vpop.f32.mrb[0].mxu0
        %v654 = vadd.f32 %v540, %v653
        %v655 = vpop.f32.mrb[0].mxu0
        %656 = vmatprep.mubr.f32.mxu0 0.0
        %657 = vmatmul.mubr.f32.gmra.mrb[0].mxu0 %v508
        %v658 = vpop.f32.mrb[0].mxu0
        %v659 = vadd.f32 %v540, %v658
        %v660 = vpop.f32.mrb[0].mxu0
        %661 = vmatprep.mubr.f32.mxu0 0.0
        %662 = vmatmul.mubr.f32.gmra.mrb[0].mxu0 %v513
        %v663 = vpop.f32.mrb[0].mxu0
        %v664 = vadd.f32 %v540, %v663
        %v665 = vpop.f32.mrb[0].mxu0
        %666 = vmatprep.mubr.f32.mxu0 0.0
        %667 = vmatmul.mubr.f32.gmra.mrb[0].mxu0 %v518
        %v668 = vpop.f32.mrb[0].mxu0
        %v669 = vadd.f32 %v540, %v668
        %v670 = vpop.f32.mrb[0].mxu0
        %671 = vmatprep.mubr.f32.mxu0 0.0
        %672 = vmatmul.mubr.f32.gmra.mrb[0].mxu0 %v523
        %v673 = vpop.f32.mrb[0].mxu0
        %v674 = vadd.f32 %v540, %v673
        %v675 = vpop.f32.mrb[0].mxu0
        %676 = vmatprep.mubr.f32.mxu0 0.0
        %677 = vmatmul.mubr.f32.gmra.mrb[0].mxu0 %v528
        %v678 = vpop.f32.mrb[0].mxu0
        %v679 = vadd.f32 %v540, %v678
        %v680 = vpop.f32.mrb[0].mxu0
        %681 = vmatprep.mubr.f32.mxu0 0.0
        %682 = vmatmul.mubr.f32.gmra.mrb[0].mxu0 %v533
        %v683 = vpop.f32.mrb[0].mxu0
        %v684 = vadd.f32 %v540, %v683
        %v685 = vpop.f32.mrb[0].mxu0
        %686 = vdwg.mxu0
        %p687 = scmp.eq.s32.totalorder %s22, 2
        %s688 = smul.u32 %s23, 128
        %p689 = scmp.ne.s32.totalorder %s22, 2
        // Predicated region
        $region57: #{tpu_custom_call.1} parent=35 // pred_check
          %p690 = pneg %p689
        $region58: #{tpu_custom_call.1} parent=35 // pred_check_branch
          %692 = sbr.rel (%p690) target = $region60
        $region59: #{tpu_custom_call.1} parent=35 // pred_region
          %v693 = vmax.f32 %v609, 0.0
          %v694 = vmax.f32 %v614, 0.0
          %v695 = vmax.f32 %v619, 0.0
          %v696 = vmax.f32 %v624, 0.0
          %v697 = vmax.f32 %v629, 0.0
          %v698 = vmax.f32 %v634, 0.0
          %v699 = vmax.f32 %v639, 0.0
          %v700 = vmax.f32 %v644, 0.0
          %v701 = vmax.f32 %v649, 0.0
          %v702 = vmax.f32 %v654, 0.0
          %v703 = vmax.f32 %v659, 0.0
          %v704 = vmax.f32 %v664, 0.0
          %v705 = vmax.f32 %v669, 0.0
          %v706 = vmax.f32 %v674, 0.0
          %v707 = vmax.f32 %v679, 0.0
          %v708 = vmax.f32 %v684, 0.0
          %709 = vst [vmem:[#allocation10] sm:$0xff] %v693
          %710 = vst [vmem:[#allocation10 + $0x8] sm:$0xff] %v694
          %711 = vst [vmem:[#allocation10 + $0x10] sm:$0xff] %v695
          %712 = vst [vmem:[#allocation10 + $0x18] sm:$0xff] %v696
          %713 = vst [vmem:[#allocation10 + $0x20] sm:$0xff] %v697
          %714 = vst [vmem:[#allocation10 + $0x28] sm:$0xff] %v698
          %715 = vst [vmem:[#allocation10 + $0x30] sm:$0xff] %v699
          %716 = vst [vmem:[#allocation10 + $0x38] sm:$0xff] %v700
          %717 = vst [vmem:[#allocation10 + $0x40] sm:$0xff] %v701
          %718 = vst [vmem:[#allocation10 + $0x48] sm:$0xff] %v702
          %719 = vst [vmem:[#allocation10 + $0x50] sm:$0xff] %v703
          %720 = vst [vmem:[#allocation10 + $0x58] sm:$0xff] %v704
          %721 = vst [vmem:[#allocation10 + $0x60] sm:$0xff] %v705
          %722 = vst [vmem:[#allocation10 + $0x68] sm:$0xff] %v706
          %723 = vst [vmem:[#allocation10 + $0x70] sm:$0xff] %v707
          %724 = vst [vmem:[#allocation10 + $0x78] sm:$0xff] %v708
          %p725 = scmp.eq.s32.totalorder %s339, 1
          // Predicated region
          $region61: #{tpu_custom_call.1} parent=59 // pred_check
            %p726 = pneg %p725
          $region62: #{tpu_custom_call.1} parent=59 // pred_check_branch
            %728 = sbr.rel (%p726) target = $region64
          $region63: #{tpu_custom_call.1} parent=59 // pred_region
            %s729 = sadd.s32 %s688, 128
            %s730 = scalar_lea.vmem [#allocation2], %s729
            %731 = vst [vmem:[%s730] sm:$0xff] %v693
            %732 = vst [vmem:[%s730 + $0x8] sm:$0xff] %v694
            %733 = vst [vmem:[%s730 + $0x10] sm:$0xff] %v695
            %734 = vst [vmem:[%s730 + $0x18] sm:$0xff] %v696
            %735 = vst [vmem:[%s730 + $0x20] sm:$0xff] %v697
            %736 = vst [vmem:[%s730 + $0x28] sm:$0xff] %v698
            %737 = vst [vmem:[%s730 + $0x30] sm:$0xff] %v699
            %738 = vst [vmem:[%s730 + $0x38] sm:$0xff] %v700
            %739 = vst [vmem:[%s730 + $0x40] sm:$0xff] %v701
            %740 = vst [vmem:[%s730 + $0x48] sm:$0xff] %v702
            %741 = vst [vmem:[%s730 + $0x50] sm:$0xff] %v703
            %742 = vst [vmem:[%s730 + $0x58] sm:$0xff] %v704
            %743 = vst [vmem:[%s730 + $0x60] sm:$0xff] %v705
            %744 = vst [vmem:[%s730 + $0x68] sm:$0xff] %v706
            %745 = vst [vmem:[%s730 + $0x70] sm:$0xff] %v707
            %746 = vst [vmem:[%s730 + $0x78] sm:$0xff] %v708
          $region64: #{tpu_custom_call.1} parent=59 // pred_fallthru
            _
          %p747 = scmp.eq.s32.totalorder %s339, 0
          // Predicated region
          $region65: #{tpu_custom_call.1} parent=59 // pred_check
            %p748 = pneg %p747
          $region66: #{tpu_custom_call.1} parent=59 // pred_check_branch
            %750 = sbr.rel (%p748) target = $region68
          $region67: #{tpu_custom_call.1} parent=59 // pred_region
            %s751 = scalar_lea.vmem [#allocation2], %s688
            %752 = vst [vmem:[%s751] sm:$0xff] %v693
            %753 = vst [vmem:[%s751 + $0x8] sm:$0xff] %v694
            %754 = vst [vmem:[%s751 + $0x10] sm:$0xff] %v695
            %755 = vst [vmem:[%s751 + $0x18] sm:$0xff] %v696
            %756 = vst [vmem:[%s751 + $0x20] sm:$0xff] %v697
            %757 = vst [vmem:[%s751 + $0x28] sm:$0xff] %v698
            %758 = vst [vmem:[%s751 + $0x30] sm:$0xff] %v699
            %759 = vst [vmem:[%s751 + $0x38] sm:$0xff] %v700
            %760 = vst [vmem:[%s751 + $0x40] sm:$0xff] %v701
            %761 = vst [vmem:[%s751 + $0x48] sm:$0xff] %v702
            %762 = vst [vmem:[%s751 + $0x50] sm:$0xff] %v703
            %763 = vst [vmem:[%s751 + $0x58] sm:$0xff] %v704
            %764 = vst [vmem:[%s751 + $0x60] sm:$0xff] %v705
            %765 = vst [vmem:[%s751 + $0x68] sm:$0xff] %v706
            %766 = vst [vmem:[%s751 + $0x70] sm:$0xff] %v707
            %767 = vst [vmem:[%s751 + $0x78] sm:$0xff] %v708
          $region68: #{tpu_custom_call.1} parent=59 // pred_fallthru
            _
        $region60: #{tpu_custom_call.1} parent=35 // pred_fallthru
          _
        // Predicated region
        $region69: #{tpu_custom_call.1} parent=35 // pred_check
          %p768 = pneg %p687
        $region70: #{tpu_custom_call.1} parent=35 // pred_check_branch
          %770 = sbr.rel (%p768) target = $region72
        $region71: #{tpu_custom_call.1} parent=35 // pred_region
          %v771 = vlaneseq
          %v772 = vand.u32 %v771, 127
          %vm773 = vcmp.lt.s32.totalorder %v772, 8
          %v774 = vsel %vm773, %v609, -inf
          %v775 = vsel %vm773, %v614, -inf
          %v776 = vsel %vm773, %v619, -inf
          %v777 = vsel %vm773, %v624, -inf
          %v778 = vsel %vm773, %v629, -inf
          %v779 = vsel %vm773, %v634, -inf
          %v780 = vsel %vm773, %v639, -inf
          %v781 = vsel %vm773, %v644, -inf
          %v782 = vsel %vm773, %v649, -inf
          %v783 = vsel %vm773, %v654, -inf
          %v784 = vsel %vm773, %v659, -inf
          %v785 = vsel %vm773, %v664, -inf
          %v786 = vsel %vm773, %v669, -inf
          %v787 = vsel %vm773, %v674, -inf
          %v788 = vsel %vm773, %v679, -inf
          %v789 = vsel %vm773, %v684, -inf
          %790 = vmax.xlane.f32.xlu0 %v774
          %v791 = vpop.xlane.xlu0 %790
          %792 = vmax.xlane.f32.xlu0 %v775
          %v793 = vpop.xlane.xlu0 %792
          %794 = vmax.xlane.f32.xlu0 %v776
          %v795 = vpop.xlane.xlu0 %794
          %796 = vmax.xlane.f32.xlu0 %v777
          %v797 = vpop.xlane.xlu0 %796
          %798 = vmax.xlane.f32.xlu0 %v778
          %v799 = vpop.xlane.xlu0 %798
          %800 = vmax.xlane.f32.xlu0 %v779
          %v801 = vpop.xlane.xlu0 %800
          %802 = vmax.xlane.f32.xlu0 %v780
          %v803 = vpop.xlane.xlu0 %802
          %804 = vmax.xlane.f32.xlu0 %v781
          %v805 = vpop.xlane.xlu0 %804
          %806 = vmax.xlane.f32.xlu0 %v782
          %v807 = vpop.xlane.xlu0 %806
          %808 = vmax.xlane.f32.xlu0 %v783
          %v809 = vpop.xlane.xlu0 %808
          %810 = vmax.xlane.f32.xlu0 %v784
          %v811 = vpop.xlane.xlu0 %810
          %812 = vmax.xlane.f32.xlu0 %v785
          %v813 = vpop.xlane.xlu0 %812
          %814 = vmax.xlane.f32.xlu0 %v786
          %v815 = vpop.xlane.xlu0 %814
          %816 = vmax.xlane.f32.xlu0 %v787
          %v817 = vpop.xlane.xlu0 %816
          %818 = vmax.xlane.f32.xlu0 %v788
          %v819 = vpop.xlane.xlu0 %818
          %820 = vmax.xlane.f32.xlu0 %v789
          %v821 = vpop.xlane.xlu0 %820
          %v822 = vsub.f32 %v774, %v791
          %v823 = vsub.f32 %v775, %v793
          %v824 = vsub.f32 %v776, %v795
          %v825 = vsub.f32 %v777, %v797
          %v826 = vsub.f32 %v778, %v799
          %v827 = vsub.f32 %v779, %v801
          %v828 = vsub.f32 %v780, %v803
          %v829 = vsub.f32 %v781, %v805
          %v830 = vsub.f32 %v782, %v807
          %v831 = vsub.f32 %v783, %v809
          %v832 = vsub.f32 %v784, %v811
          %v833 = vsub.f32 %v785, %v813
          %v834 = vsub.f32 %v786, %v815
          %v835 = vsub.f32 %v787, %v817
          %v836 = vsub.f32 %v788, %v819
          %v837 = vsub.f32 %v789, %v821
          %v838 = vmul.f32 %v822, 1.442695
          %v839 = vpow.pop %v838
          %v840 = vmul.f32 %v823, 1.442695
          %v841 = vpow.pop %v840
          %v842 = vmul.f32 %v824, 1.442695
          %v843 = vpow.pop %v842
          %v844 = vmul.f32 %v825, 1.442695
          %v845 = vpow.pop %v844
          %v846 = vmul.f32 %v826, 1.442695
          %v847 = vpow.pop %v846
          %v848 = vmul.f32 %v827, 1.442695
          %v849 = vpow.pop %v848
          %v850 = vmul.f32 %v828, 1.442695
          %v851 = vpow.pop %v850
          %v852 = vmul.f32 %v829, 1.442695
          %v853 = vpow.pop %v852
          %v854 = vmul.f32 %v830, 1.442695
          %v855 = vpow.pop %v854
          %v856 = vmul.f32 %v831, 1.442695
          %v857 = vpow.pop %v856
          %v858 = vmul.f32 %v832, 1.442695
          %v859 = vpow.pop %v858
          %v860 = vmul.f32 %v833, 1.442695
          %v861 = vpow.pop %v860
          %v862 = vmul.f32 %v834, 1.442695
          %v863 = vpow.pop %v862
          %v864 = vmul.f32 %v835, 1.442695
          %v865 = vpow.pop %v864
          %v866 = vmul.f32 %v836, 1.442695
          %v867 = vpow.pop %v866
          %v868 = vmul.f32 %v837, 1.442695
          %v869 = vpow.pop %v868
          %870 = vadd.xlane.f32.xlu0 %v839
          %v871 = vpop.xlane.xlu0 %870
          %872 = vadd.xlane.f32.xlu0 %v841
          %v873 = vpop.xlane.xlu0 %872
          %874 = vadd.xlane.f32.xlu0 %v843
          %v875 = vpop.xlane.xlu0 %874
          %876 = vadd.xlane.f32.xlu0 %v845
          %v877 = vpop.xlane.xlu0 %876
          %878 = vadd.xlane.f32.xlu0 %v847
          %v879 = vpop.xlane.xlu0 %878
          %880 = vadd.xlane.f32.xlu0 %v849
          %v881 = vpop.xlane.xlu0 %880
          %882 = vadd.xlane.f32.xlu0 %v851
          %v883 = vpop.xlane.xlu0 %882
          %884 = vadd.xlane.f32.xlu0 %v853
          %v885 = vpop.xlane.xlu0 %884
          %886 = vadd.xlane.f32.xlu0 %v855
          %v887 = vpop.xlane.xlu0 %886
          %888 = vadd.xlane.f32.xlu0 %v857
          %v889 = vpop.xlane.xlu0 %888
          %890 = vadd.xlane.f32.xlu0 %v859
          %v891 = vpop.xlane.xlu0 %890
          %892 = vadd.xlane.f32.xlu0 %v861
          %v893 = vpop.xlane.xlu0 %892
          %894 = vadd.xlane.f32.xlu0 %v863
          %v895 = vpop.xlane.xlu0 %894
          %896 = vadd.xlane.f32.xlu0 %v865
          %v897 = vpop.xlane.xlu0 %896
          %898 = vadd.xlane.f32.xlu0 %v867
          %v899 = vpop.xlane.xlu0 %898
          %900 = vadd.xlane.f32.xlu0 %v869
          %v901 = vpop.xlane.xlu0 %900
          %v902 = vlog2.pop %v871
          %v903 = vmul.f32 %v902, 0.6931472
          %v904 = vlog2.pop %v873
          %v905 = vmul.f32 %v904, 0.6931472
          %v906 = vlog2.pop %v875
          %v907 = vmul.f32 %v906, 0.6931472
          %v908 = vlog2.pop %v877
          %v909 = vmul.f32 %v908, 0.6931472
          %v910 = vlog2.pop %v879
          %v911 = vmul.f32 %v910, 0.6931472
          %v912 = vlog2.pop %v881
          %v913 = vmul.f32 %v912, 0.6931472
          %v914 = vlog2.pop %v883
          %v915 = vmul.f32 %v914, 0.6931472
          %v916 = vlog2.pop %v885
          %v917 = vmul.f32 %v916, 0.6931472
          %v918 = vlog2.pop %v887
          %v919 = vmul.f32 %v918, 0.6931472
          %v920 = vlog2.pop %v889
          %v921 = vmul.f32 %v920, 0.6931472
          %v922 = vlog2.pop %v891
          %v923 = vmul.f32 %v922, 0.6931472
          %v924 = vlog2.pop %v893
          %v925 = vmul.f32 %v924, 0.6931472
          %v926 = vlog2.pop %v895
          %v927 = vmul.f32 %v926, 0.6931472
          %v928 = vlog2.pop %v897
          %v929 = vmul.f32 %v928, 0.6931472
          %v930 = vlog2.pop %v899
          %v931 = vmul.f32 %v930, 0.6931472
          %v932 = vlog2.pop %v901
          %v933 = vmul.f32 %v932, 0.6931472
          %v934 = vsub.f32 %v822, %v903
          %v935 = vsub.f32 %v823, %v905
          %v936 = vsub.f32 %v824, %v907
          %v937 = vsub.f32 %v825, %v909
          %v938 = vsub.f32 %v826, %v911
          %v939 = vsub.f32 %v827, %v913
          %v940 = vsub.f32 %v828, %v915
          %v941 = vsub.f32 %v829, %v917
          %v942 = vsub.f32 %v830, %v919
          %v943 = vsub.f32 %v831, %v921
          %v944 = vsub.f32 %v832, %v923
          %v945 = vsub.f32 %v833, %v925
          %v946 = vsub.f32 %v834, %v927
          %v947 = vsub.f32 %v835, %v929
          %v948 = vsub.f32 %v836, %v931
          %v949 = vsub.f32 %v837, %v933
          %v950 = vsel %vm773, %v934, 0.0
          %v951 = vsel %vm773, %v935, 0.0
          %v952 = vsel %vm773, %v936, 0.0
          %v953 = vsel %vm773, %v937, 0.0
          %v954 = vsel %vm773, %v938, 0.0
          %v955 = vsel %vm773, %v939, 0.0
          %v956 = vsel %vm773, %v940, 0.0
          %v957 = vsel %vm773, %v941, 0.0
          %v958 = vsel %vm773, %v942, 0.0
          %v959 = vsel %vm773, %v943, 0.0
          %v960 = vsel %vm773, %v944, 0.0
          %v961 = vsel %vm773, %v945, 0.0
          %v962 = vsel %vm773, %v946, 0.0
          %v963 = vsel %vm773, %v947, 0.0
          %v964 = vsel %vm773, %v948, 0.0
          %v965 = vsel %vm773, %v949, 0.0
          %966 = vst [vmem:[#allocation10] sm:$0xff] %v950
          %967 = vst [vmem:[#allocation10 + $0x8] sm:$0xff] %v951
          %968 = vst [vmem:[#allocation10 + $0x10] sm:$0xff] %v952
          %969 = vst [vmem:[#allocation10 + $0x18] sm:$0xff] %v953
          %970 = vst [vmem:[#allocation10 + $0x20] sm:$0xff] %v954
          %971 = vst [vmem:[#allocation10 + $0x28] sm:$0xff] %v955
          %972 = vst [vmem:[#allocation10 + $0x30] sm:$0xff] %v956
          %973 = vst [vmem:[#allocation10 + $0x38] sm:$0xff] %v957
          %974 = vst [vmem:[#allocation10 + $0x40] sm:$0xff] %v958
          %975 = vst [vmem:[#allocation10 + $0x48] sm:$0xff] %v959
          %976 = vst [vmem:[#allocation10 + $0x50] sm:$0xff] %v960
          %977 = vst [vmem:[#allocation10 + $0x58] sm:$0xff] %v961
          %978 = vst [vmem:[#allocation10 + $0x60] sm:$0xff] %v962
          %979 = vst [vmem:[#allocation10 + $0x68] sm:$0xff] %v963
          %980 = vst [vmem:[#allocation10 + $0x70] sm:$0xff] %v964
          %981 = vst [vmem:[#allocation10 + $0x78] sm:$0xff] %v965
        $region72: #{tpu_custom_call.1} parent=35 // pred_fallthru
          _
        // Predicated region
        $region73: #{tpu_custom_call.1} parent=35 // pred_check
          %p982 = pneg %p147
        $region74: #{tpu_custom_call.1} parent=35 // pred_check_branch
          %984 = sbr.rel (%p982) target = $region76
        $region75: #{tpu_custom_call.1} parent=35 // pred_region
          %s985 = smul.u32 16, %s23
          %s987 = ssub.s32 2048, 2048
          %988 = vsyncadd [#allocation5], %s987
          %s989 = smul.addr %s985, 128
          %s990 = scalar_lea.hbm %s4, %s989
          %s991 = sshll.u32 [#allocation10], 4
          %s992 = int_to_ptr.vmem [resolvable:$true] %s991
          %997 = dma.vmem_to_hbm [thread:$0]  %s992, 2048, %s990, [#allocation5], 128, 128, 8
        $region76: #{tpu_custom_call.1} parent=35 // pred_fallthru
          _
        // Predicated region
        $region77: #{tpu_custom_call.1} parent=35 // pred_check
          %p998 = pneg %p147
        $region78: #{tpu_custom_call.1} parent=35 // pred_check_branch
          %1000 = sbr.rel (%p998) target = $region80
        $region79: #{tpu_custom_call.1} parent=35 // pred_region
          %1001 = dma.done [#allocation5], 2048
        $region80: #{tpu_custom_call.1} parent=35 // pred_fallthru
          _
      $region36: #{tpu_custom_call.1} parent=5 // pred_fallthru
        _
      %p1002 = scmp.le.s32.totalorder 2, %s13
      // Predicated region
      $region81: #{tpu_custom_call.1} parent=5 // pred_check
        %p1003 = pneg %p1002
      $region82: #{tpu_custom_call.1} parent=5 // pred_check_branch
        %1005 = sbr.rel (%p1003) target = $region84
      $region83: #{tpu_custom_call.1} parent=5 // pred_region
        %s1006 = ssub.s32 %s13, 2
      $region84: #{tpu_custom_call.1} parent=5 // pred_fallthru
        _
    $region6: #{tpu_custom_call.1} parent=1 // loop_footer
      %s17 = sadd.s32 1, %s13
    $region7: #{tpu_custom_call.1} parent=1 // loop_footer_branch
      %12 = sbr.rel target = $region3
    $region8: #{tpu_custom_call.1} parent=1 // loop_exit
      _
    %1007 = vsyncpa [#allocation4], 1
    %s1008 = scalar_lea.sflag [#allocation4], 1
    %1009 = vsyncpa %s1008, 1
    %1010 = vsyncpa [#allocation7], 1
    %1011 = vsyncpa [#allocation5], 1
    %s1012 = scalar_lea.sflag [#allocation5], 1
    %1013 = vsyncpa %s1012, 1

</llo_original>
